<compile_context>
chip_gen: v6e
topology: v6e:2x2x1
jax: 0.10.0
libtpu: 0.0.40
codegen_flags: <defaults>
</compile_context>

<pallas_src>
import math

import jax
import jax.numpy as jnp
from jax import lax
from jax.experimental import pallas as pl
from jax.experimental.pallas import tpu as pltpu


def noisy_linear_kernel(x_ref, wmu_ref, wsig_ref, eps_in_ref, eps_out_ref,
                        bmu_ref, bsig_ref, beps_ref, o_ref, acc_ref):
    """One (out-tile, k-tile) grid step.

    Grid = (out_f_p // TN, in_f_p // TK); axis 1 (k) is the reduction axis.
    """
    k = pl.program_id(1)

    @pl.when(k == 0)
    def _():
        acc_ref[...] = jnp.zeros_like(acc_ref)

    # Factorized noise: epsilon tile = eps_out (TN,1) * eps_in (1,TK).
    # Effective weight tile on the VPU.
    w = wmu_ref[...] + wsig_ref[...] * (eps_out_ref[...] * eps_in_ref[...])

    # y_tile += x_tile (B,TK) . w_tile (TN,TK), contracting the last dims
    # (no in-kernel transpose; MXU matmul with f32 accumulate).
    acc_ref[...] += lax.dot_general(
        x_ref[...], w,
        dimension_numbers=(((1,), (1,)), ((), ())),
        preferred_element_type=jnp.float32)

    @pl.when(k == pl.num_programs(1) - 1)
    def _():
        b = bmu_ref[...] + bsig_ref[...] * beps_ref[...]      # (1, TN)
        o_ref[...] = (acc_ref[...] + b).astype(o_ref.dtype)


def _round_up(n, m):
    return ((n + m - 1) // m) * m


def _pad2(a, rows, cols):
    return jnp.pad(a, ((0, rows - a.shape[0]), (0, cols - a.shape[1])))


def noisy_linear_forward(x, weight_mu, weight_sigma, bias_mu, bias_sigma,
                         eps_in, eps_out, *, tn=256, tk=512):
    """Fused NoisyLinear forward: y = x @ (mu + sigma * (eps_out ⊗ eps_in)).T
                                       + (b_mu + b_sigma * eps_out).

    x:            [B, in_features]
    weight_mu/sigma: [out_features, in_features]
    bias_mu/sigma:   [out_features]
    eps_in:       [in_features]   (factorized noise, input side)
    eps_out:      [out_features]  (factorized noise, output side == bias noise)
    """
    B, in_f = x.shape
    out_f, _ = weight_mu.shape

    # Lane-dense, tile-aligned padding (zeros -> padded columns contribute 0).
    Bp = _round_up(B, 8)
    tk = min(tk, _round_up(in_f, 128))
    tn = min(tn, _round_up(out_f, 128))
    in_fp = _round_up(in_f, tk)
    out_fp = _round_up(out_f, tn)

    xp    = _pad2(x, Bp, in_fp)
    wmu   = _pad2(weight_mu, out_fp, in_fp)
    wsig  = _pad2(weight_sigma, out_fp, in_fp)
    ein   = _pad2(eps_in.reshape(1, in_f), 1, in_fp)       # [1, in_fp]
    eout  = _pad2(eps_out.reshape(out_f, 1), out_fp, 1)    # [out_fp, 1]
    bmu   = _pad2(bias_mu.reshape(1, out_f), 1, out_fp)    # [1, out_fp]
    bsig  = _pad2(bias_sigma.reshape(1, out_f), 1, out_fp)
    beps  = _pad2(eps_out.reshape(1, out_f), 1, out_fp)    # bias noise = eps_out

    grid = (out_fp // tn, in_fp // tk)

    out_p = pl.pallas_call(
        noisy_linear_kernel,
        out_shape=jax.ShapeDtypeStruct((Bp, out_fp), x.dtype),
        grid_spec=pltpu.PrefetchScalarGridSpec(
            num_scalar_prefetch=0,
            grid=grid,
            in_specs=[
                pl.BlockSpec((Bp, tk), lambda j, k: (0, k)),   # x
                pl.BlockSpec((tn, tk), lambda j, k: (j, k)),   # weight_mu
                pl.BlockSpec((tn, tk), lambda j, k: (j, k)),   # weight_sigma
                pl.BlockSpec((1, tk),  lambda j, k: (0, k)),   # eps_in  (row)
                pl.BlockSpec((tn, 1),  lambda j, k: (j, 0)),   # eps_out (col)
                pl.BlockSpec((1, tn),  lambda j, k: (0, j)),   # bias_mu
                pl.BlockSpec((1, tn),  lambda j, k: (0, j)),   # bias_sigma
                pl.BlockSpec((1, tn),  lambda j, k: (0, j)),   # bias_epsilon
            ],
            out_specs=pl.BlockSpec((Bp, tn), lambda j, k: (0, j)),
            scratch_shapes=[pltpu.VMEM((Bp, tn), jnp.float32)],
        ),
        compiler_params=pltpu.CompilerParams(
            dimension_semantics=("parallel", "arbitrary")),
    )(xp, wmu, wsig, ein, eout, bmu, bsig, beps)

    return out_p[:B, :out_f]


def _scale_noise(key, size):
    """f(x) = sign(x) * sqrt(|x|) on standard-normal noise (NoisyNet)."""
    x = jax.random.normal(key, (size,), dtype=jnp.float32)
    return jnp.sign(x) * jnp.sqrt(jnp.abs(x))


def make_noisy_linear_params(key, in_features, out_features, sigma_init=0.5):
    """Parameters + factorized noise matching NoisyLinear.__init__ /
    reset_parameters / reset_noise shapes & semantics (JAX RNG, not torch RNG)."""
    k_wmu, k_bmu, k_ein, k_eout = jax.random.split(key, 4)
    bound = 1.0 / math.sqrt(in_features)

    weight_mu = jax.random.uniform(
        k_wmu, (out_features, in_features), jnp.float32, -bound, bound)
    bias_mu = jax.random.uniform(
        k_bmu, (out_features,), jnp.float32, -bound, bound)

    sigma_val = sigma_init / math.sqrt(in_features)
    weight_sigma = jnp.full((out_features, in_features), sigma_val, jnp.float32)
    bias_sigma = jnp.full((out_features,), sigma_val, jnp.float32)

    eps_in = _scale_noise(k_ein, in_features)     # factorized noise factors
    eps_out = _scale_noise(k_eout, out_features)  # (weight_eps = outer(eps_out, eps_in))

    return dict(weight_mu=weight_mu, weight_sigma=weight_sigma,
                bias_mu=bias_mu, bias_sigma=bias_sigma,
                eps_in=eps_in, eps_out=eps_out)


if __name__ == "__main__":
    # Tiny demo shapes (per-call overhead dominates here; the tiling only pays
    # off at production in_f/out_f >= 512).
    B, IN_F, OUT_F = 8, 32, 16

    key = jax.random.PRNGKey(0)
    k_params, k_x = jax.random.split(key)
    params = make_noisy_linear_params(k_params, IN_F, OUT_F, sigma_init=0.5)
    x = jax.random.normal(k_x, (B, IN_F), dtype=jnp.float32)

    out = noisy_linear_forward(
        x,
        params["weight_mu"], params["weight_sigma"],
        params["bias_mu"], params["bias_sigma"],
        params["eps_in"], params["eps_out"],
    )
    out = jax.block_until_ready(out)

    # Pure-JAX reference identical to PyTorch NoisyLinear.forward().
    w_eps = jnp.outer(params["eps_out"], params["eps_in"])      # eps_out.ger(eps_in)
    w_eff = params["weight_mu"] + params["weight_sigma"] * w_eps
    b_eff = params["bias_mu"] + params["bias_sigma"] * params["eps_out"]
    ref = x @ w_eff.T + b_eff

    assert out.shape == (B, OUT_F)
    assert jnp.allclose(out, ref, atol=1e-5, rtol=1e-5), "mismatch vs reference"

    print("KERNEL_OK")
</pallas_src>

<mosaic_0001>
module attributes {stable_mosaic.version = 11 : i64} {
  func.func @noisy_linear_kernel(%arg0: i32, %arg1: i32, %arg2: memref<8x128xf32, #tpu.memory_space<vmem>>, %arg3: memref<128x128xf32, #tpu.memory_space<vmem>>, %arg4: memref<128x128xf32, #tpu.memory_space<vmem>>, %arg5: memref<1x128xf32, #tpu.memory_space<vmem>>, %arg6: memref<128x1xf32, #tpu.memory_space<vmem>>, %arg7: memref<1x128xf32, #tpu.memory_space<vmem>>, %arg8: memref<1x128xf32, #tpu.memory_space<vmem>>, %arg9: memref<1x128xf32, #tpu.memory_space<vmem>>, %arg10: memref<8x128xf32, #tpu.memory_space<vmem>>, %arg11: memref<8x128xf32, #tpu.memory_space<vmem>>) attributes {dimension_semantics = [#tpu.dimension_semantics<parallel>, #tpu.dimension_semantics<arbitrary>], iteration_bounds = array<i64: 1, 1>, scalar_prefetch = 0 : i64, scratch_operands = 1 : i64, tpu.core_type = #tpu.core_type<tc>, window_params = [{transform_indices = @transform_0, window_bounds = array<i64: 8, 128>}, {transform_indices = @transform_1, window_bounds = array<i64: 128, 128>}, {transform_indices = @transform_2, window_bounds = array<i64: 128, 128>}, {transform_indices = @transform_3, window_bounds = array<i64: 1, 128>}, {transform_indices = @transform_4, window_bounds = array<i64: 128, 1>}, {transform_indices = @transform_5, window_bounds = array<i64: 1, 128>}, {transform_indices = @transform_6, window_bounds = array<i64: 1, 128>}, {transform_indices = @transform_7, window_bounds = array<i64: 1, 128>}, {transform_indices = @transform_8, window_bounds = array<i64: 8, 128>}]} {
    %c0_i32 = arith.constant 0 : i32
    %0 = arith.cmpi eq, %arg1, %c0_i32 : i32
    %1 = arith.extui %0 : i1 to i32
    %c0_i32_0 = arith.constant 0 : i32
    %2 = arith.cmpi ne, %1, %c0_i32_0 : i32
    scf.if %2 {
      %cst_16 = arith.constant 0.000000e+00 : f32
      %20 = vector.broadcast %cst_16 : f32 to vector<8x128xf32>
      %c0_17 = arith.constant 0 : index
      %c0_18 = arith.constant 0 : index
      %21 = vector.load %arg11[%c0_17, %c0_18] : memref<8x128xf32, #tpu.memory_space<vmem>>, vector<8x128xf32>
      tpu.vector_store %arg11[%c0_17, %c0_18], %20 {strides = array<i32>} : memref<8x128xf32, #tpu.memory_space<vmem>>, vector<8x128xf32>,
    } else {
    }
    %c0 = arith.constant 0 : index
    %c0_1 = arith.constant 0 : index
    %3 = vector.load %arg3[%c0, %c0_1] : memref<128x128xf32, #tpu.memory_space<vmem>>, vector<128x128xf32>
    %c0_2 = arith.constant 0 : index
    %c0_3 = arith.constant 0 : index
    %4 = vector.load %arg4[%c0_2, %c0_3] : memref<128x128xf32, #tpu.memory_space<vmem>>, vector<128x128xf32>
    %c0_4 = arith.constant 0 : index
    %c0_5 = arith.constant 0 : index
    %5 = vector.load %arg6[%c0_4, %c0_5] : memref<128x1xf32, #tpu.memory_space<vmem>>, vector<128x1xf32>
    %c0_6 = arith.constant 0 : index
    %c0_7 = arith.constant 0 : index
    %6 = vector.load %arg5[%c0_6, %c0_7] : memref<1x128xf32, #tpu.memory_space<vmem>>, vector<1x128xf32>
    %7 = vector.broadcast %5 : vector<128x1xf32> to vector<128x128xf32>
    %8 = vector.broadcast %6 : vector<1x128xf32> to vector<128x128xf32>
    %9 = arith.mulf %7, %8 : vector<128x128xf32>
    %10 = arith.mulf %4, %9 : vector<128x128xf32>
    %11 = arith.addf %3, %10 : vector<128x128xf32>
    %c0_8 = arith.constant 0 : index
    %c0_9 = arith.constant 0 : index
    %12 = vector.load %arg11[%c0_8, %c0_9] : memref<8x128xf32, #tpu.memory_space<vmem>>, vector<8x128xf32>
    %c0_10 = arith.constant 0 : index
    %c0_11 = arith.constant 0 : index
    %13 = vector.load %arg2[%c0_10, %c0_11] : memref<8x128xf32, #tpu.memory_space<vmem>>, vector<8x128xf32>
    %cst = arith.constant dense<0.000000e+00> : vector<8x128xf32>
    %14 = tpu.matmul %13, %11, %cst {dimension_numbers = #tpu.dot_dimension_numbers<[1], [1], [0], [0], [0, 0, 1, 0], [], []>} : vector<8x128xf32>, vector<128x128xf32>, vector<8x128xf32> -> vector<8x128xf32>
    %15 = arith.addf %12, %14 : vector<8x128xf32>
    %c0_12 = arith.constant 0 : index
    %c0_13 = arith.constant 0 : index
    %16 = vector.load %arg11[%c0_12, %c0_13] : memref<8x128xf32, #tpu.memory_space<vmem>>, vector<8x128xf32>
    tpu.vector_store %arg11[%c0_12, %c0_13], %15 {strides = array<i32>} : memref<8x128xf32, #tpu.memory_space<vmem>>, vector<8x128xf32>,
    %c0_i32_14 = arith.constant 0 : i32
    %17 = arith.cmpi eq, %arg1, %c0_i32_14 : i32
    %18 = arith.extui %17 : i1 to i32
    %c0_i32_15 = arith.constant 0 : i32
    %19 = arith.cmpi ne, %18, %c0_i32_15 : i32
    scf.if %19 {
      %c0_16 = arith.constant 0 : index
      %c0_17 = arith.constant 0 : index
      %20 = vector.load %arg7[%c0_16, %c0_17] : memref<1x128xf32, #tpu.memory_space<vmem>>, vector<1x128xf32>
      %c0_18 = arith.constant 0 : index
      %c0_19 = arith.constant 0 : index
      %21 = vector.load %arg8[%c0_18, %c0_19] : memref<1x128xf32, #tpu.memory_space<vmem>>, vector<1x128xf32>
      %c0_20 = arith.constant 0 : index
      %c0_21 = arith.constant 0 : index
      %22 = vector.load %arg9[%c0_20, %c0_21] : memref<1x128xf32, #tpu.memory_space<vmem>>, vector<1x128xf32>
      %23 = arith.mulf %21, %22 : vector<1x128xf32>
      %24 = arith.addf %20, %23 : vector<1x128xf32>
      %c0_22 = arith.constant 0 : index
      %c0_23 = arith.constant 0 : index
      %25 = vector.load %arg11[%c0_22, %c0_23] : memref<8x128xf32, #tpu.memory_space<vmem>>, vector<8x128xf32>
      %26 = vector.broadcast %24 : vector<1x128xf32> to vector<8x128xf32>
      %27 = arith.addf %25, %26 : vector<8x128xf32>
      %c0_24 = arith.constant 0 : index
      %c0_25 = arith.constant 0 : index
      %28 = vector.load %arg10[%c0_24, %c0_25] : memref<8x128xf32, #tpu.memory_space<vmem>>, vector<8x128xf32>
      tpu.vector_store %arg10[%c0_24, %c0_25], %27 {strides = array<i32>} : memref<8x128xf32, #tpu.memory_space<vmem>>, vector<8x128xf32>,
    } else {
    }
    return
  }
  func.func @transform_0(%arg0: i32, %arg1: i32) -> (i32, i32) {
    %c0_i32 = arith.constant 0 : i32
    %c0_i32_0 = arith.constant 0 : i32
    return %c0_i32, %arg1 : i32, i32
  }
  func.func @transform_1(%arg0: i32, %arg1: i32) -> (i32, i32) {
    %c0_i32 = arith.constant 0 : i32
    return %arg0, %arg1 : i32, i32
  }
  func.func @transform_2(%arg0: i32, %arg1: i32) -> (i32, i32) {
    %c0_i32 = arith.constant 0 : i32
    return %arg0, %arg1 : i32, i32
  }
  func.func @transform_3(%arg0: i32, %arg1: i32) -> (i32, i32) {
    %c0_i32 = arith.constant 0 : i32
    %c0_i32_0 = arith.constant 0 : i32
    return %c0_i32, %arg1 : i32, i32
  }
  func.func @transform_4(%arg0: i32, %arg1: i32) -> (i32, i32) {
    %c0_i32 = arith.constant 0 : i32
    %c0_i32_0 = arith.constant 0 : i32
    return %arg0, %c0_i32 : i32, i32
  }
  func.func @transform_5(%arg0: i32, %arg1: i32) -> (i32, i32) {
    %c0_i32 = arith.constant 0 : i32
    %c0_i32_0 = arith.constant 0 : i32
    return %c0_i32, %arg0 : i32, i32
  }
  func.func @transform_6(%arg0: i32, %arg1: i32) -> (i32, i32) {
    %c0_i32 = arith.constant 0 : i32
    %c0_i32_0 = arith.constant 0 : i32
    return %c0_i32, %arg0 : i32, i32
  }
  func.func @transform_7(%arg0: i32, %arg1: i32) -> (i32, i32) {
    %c0_i32 = arith.constant 0 : i32
    %c0_i32_0 = arith.constant 0 : i32
    return %c0_i32, %arg0 : i32, i32
  }
  func.func @transform_8(%arg0: i32, %arg1: i32) -> (i32, i32) {
    %c0_i32 = arith.constant 0 : i32
    %c0_i32_0 = arith.constant 0 : i32
    return %c0_i32, %arg0 : i32, i32
  }
}

</mosaic_0001>

<llo_original>
// kernel: tpu_custom_call.1
$region0: #{tpu_custom_call.1}
  #allocation0 [shape = 'u32[]', space=smem, size = 0x4, offset = 0x4, fixed_abs, tag = 'smem constant byte address 0x4 - core index']
  #allocation1 [shape = 'u32[144,128]{1,0:T(1,128)}', space=vmem, size = 0x12000, scoped, tag = 'internal scratch']
  #allocation2 [shape = 'f32[8,128]{1,0:T(8,128)}', space=vmem, size = 0x1000, scoped, tag = 'scratch operand']
  %s0 = inlined_call_operand.hbm [shape: f32[8,128], index: 0, kind: input, shape index: {}]
  %s1 = inlined_call_operand.vmem [shape: f32[128,128], index: 1, kind: input, shape index: {}]
  %s2 = inlined_call_operand.hbm [shape: f32[128,128], index: 2, kind: input, shape index: {}]
  %s3 = inlined_call_operand.vmem [shape: f32[1,128], index: 3, kind: input, shape index: {}]
  %s4 = inlined_call_operand.vmem [shape: f32[128,1], index: 4, kind: input, shape index: {}]
  %s5 = inlined_call_operand.vmem [shape: f32[1,128], index: 5, kind: input, shape index: {}]
  %s6 = inlined_call_operand.vmem [shape: f32[1,128], index: 6, kind: input, shape index: {}]
  %s7 = inlined_call_operand.vmem [shape: f32[1,128], index: 7, kind: input, shape index: {}]
  %s8 = inlined_call_operand.hbm [shape: f32[8,128], index: 8, kind: output, shape index: {}]
  %s9 = sld [smem:[#allocation0]]
  $region58: #{tpu_custom_call.1} parent=0
    _
  %s11 = ssub.s32 1, %s9
  %s12 = scalar_select 0, %s11, %s9
  $region1: #{tpu_custom_call.1} parent=0
    #allocation3 [shape = 'u8[4096]{0}', space=vmem, size = 0x1000, scoped, tag = 'input window, operand 0, single buffered']
    #allocation4 [shape = 's32[1]{0}', space=sflag, size = 0x4, scoped, tag = 'scoped memory for tpu_custom_call.1']
    #allocation5 [shape = 's32[1]{0}', space=sflag, size = 0x4, scoped, tag = 'scoped memory for tpu_custom_call.1']
    #allocation6 [shape = 'u8[65536]{0}', space=vmem, size = 0x10000, scoped, tag = 'input window, operand 2, single buffered']
    #allocation7 [shape = 's32[1]{0}', space=sflag, size = 0x4, scoped, tag = 'scoped memory for tpu_custom_call.1']
    #allocation8 [shape = 'u8[4096]{0}', space=vmem, size = 0x1000, scoped, tag = 'output window, operand 0, single buffered']
    %13 = vsyncpa [#allocation4], 0
    %14 = vsyncpa [#allocation7], 0
    %15 = vsyncpa [#allocation5], 0
    // Predicated region
    $region2: #{tpu_custom_call.1} parent=1 // pred_check
      _
    $region3: #{tpu_custom_call.1} parent=1 // pred_check_branch
      %17 = sbr.rel (0) target = $region5
    $region4: #{tpu_custom_call.1} parent=1 // pred_region
      %s19 = ssub.s32 128, 128
      %20 = vsyncadd [#allocation4], %s19
      %s22 = sshll.u32 [#allocation3], 4
      %s23 = int_to_ptr.vmem [resolvable:$true] %s22
      %25 = dma.hbm_to_vmem [thread:$0]  %s0, 128, %s23, [#allocation4]
    $region5: #{tpu_custom_call.1} parent=1 // pred_fallthru
      _
    // Predicated region
    $region6: #{tpu_custom_call.1} parent=1 // pred_check
      _
    $region7: #{tpu_custom_call.1} parent=1 // pred_check_branch
      %27 = sbr.rel (0) target = $region9
    $region8: #{tpu_custom_call.1} parent=1 // pred_region
      _
    $region9: #{tpu_custom_call.1} parent=1 // pred_fallthru
      _
    // Predicated region
    $region10: #{tpu_custom_call.1} parent=1 // pred_check
      _
    $region11: #{tpu_custom_call.1} parent=1 // pred_check_branch
      %29 = sbr.rel (0) target = $region13
    $region12: #{tpu_custom_call.1} parent=1 // pred_region
      %s31 = ssub.s32 2048, 2048
      %32 = vsyncadd [#allocation7], %s31
      %s33 = sshll.u32 [#allocation6], 4
      %s34 = int_to_ptr.vmem [resolvable:$true] %s33
      %39 = dma.hbm_to_vmem [thread:$0]  %s2, 2048, %s34, [#allocation7], 128, 128, 8
    $region13: #{tpu_custom_call.1} parent=1 // pred_fallthru
      _
    // Predicated region
    $region14: #{tpu_custom_call.1} parent=1 // pred_check
      _
    $region15: #{tpu_custom_call.1} parent=1 // pred_check_branch
      %41 = sbr.rel (0) target = $region17
    $region16: #{tpu_custom_call.1} parent=1 // pred_region
      _
    $region17: #{tpu_custom_call.1} parent=1 // pred_fallthru
      _
    // Predicated region
    $region18: #{tpu_custom_call.1} parent=1 // pred_check
      _
    $region19: #{tpu_custom_call.1} parent=1 // pred_check_branch
      %43 = sbr.rel (0) target = $region21
    $region20: #{tpu_custom_call.1} parent=1 // pred_region
      _
    $region21: #{tpu_custom_call.1} parent=1 // pred_fallthru
      _
    // Predicated region
    $region22: #{tpu_custom_call.1} parent=1 // pred_check
      _
    $region23: #{tpu_custom_call.1} parent=1 // pred_check_branch
      %45 = sbr.rel (0) target = $region25
    $region24: #{tpu_custom_call.1} parent=1 // pred_region
      _
    $region25: #{tpu_custom_call.1} parent=1 // pred_fallthru
      _
    // Predicated region
    $region26: #{tpu_custom_call.1} parent=1 // pred_check
      _
    $region27: #{tpu_custom_call.1} parent=1 // pred_check_branch
      %47 = sbr.rel (0) target = $region29
    $region28: #{tpu_custom_call.1} parent=1 // pred_region
      _
    $region29: #{tpu_custom_call.1} parent=1 // pred_fallthru
      _
    // Predicated region
    $region30: #{tpu_custom_call.1} parent=1 // pred_check
      _
    $region31: #{tpu_custom_call.1} parent=1 // pred_check_branch
      %49 = sbr.rel (0) target = $region33
    $region32: #{tpu_custom_call.1} parent=1 // pred_region
      _
    $region33: #{tpu_custom_call.1} parent=1 // pred_fallthru
      _
    // Predicated region
    $region34: #{tpu_custom_call.1} parent=1 // pred_check
      _
    $region35: #{tpu_custom_call.1} parent=1 // pred_check_branch
      %51 = sbr.rel (0) target = $region37
    $region36: #{tpu_custom_call.1} parent=1 // pred_region
      %52 = dma.done [#allocation4], 128
    $region37: #{tpu_custom_call.1} parent=1 // pred_fallthru
      _
    // Predicated region
    $region38: #{tpu_custom_call.1} parent=1 // pred_check
      _
    $region39: #{tpu_custom_call.1} parent=1 // pred_check_branch
      %54 = sbr.rel (0) target = $region41
    $region40: #{tpu_custom_call.1} parent=1 // pred_region
      %55 = dma.done [#allocation7], 2048
    $region41: #{tpu_custom_call.1} parent=1 // pred_fallthru
      _
    %p56 = scmp.eq.s32.totalorder 0, 0
    // Predicated region
    $region42: #{tpu_custom_call.1} parent=1 // pred_check
      %p57 = pneg %p56
    $region43: #{tpu_custom_call.1} parent=1 // pred_check_branch
      %59 = sbr.rel (%p57) target = $region45
    $region44: #{tpu_custom_call.1} parent=1 // pred_region
      %60 = vst [vmem:[#allocation2] sm:$0xff] 0.0
    $region45: #{tpu_custom_call.1} parent=1 // pred_fallthru
      _
    %v61 = vld [vmem:[%s1] sm:$0xff]
    %v62 = vld [vmem:[%s1 + $0x8] sm:$0xff]
    %v63 = vld [vmem:[%s1 + $0x10] sm:$0xff]
    %v64 = vld [vmem:[%s1 + $0x18] sm:$0xff]
    %v65 = vld [vmem:[%s1 + $0x20] sm:$0xff]
    %v66 = vld [vmem:[%s1 + $0x28] sm:$0xff]
    %v67 = vld [vmem:[%s1 + $0x30] sm:$0xff]
    %v68 = vld [vmem:[%s1 + $0x38] sm:$0xff]
    %v69 = vld [vmem:[%s1 + $0x40] sm:$0xff]
    %v70 = vld [vmem:[%s1 + $0x48] sm:$0xff]
    %v71 = vld [vmem:[%s1 + $0x50] sm:$0xff]
    %v72 = vld [vmem:[%s1 + $0x58] sm:$0xff]
    %v73 = vld [vmem:[%s1 + $0x60] sm:$0xff]
    %v74 = vld [vmem:[%s1 + $0x68] sm:$0xff]
    %v75 = vld [vmem:[%s1 + $0x70] sm:$0xff]
    %v76 = vld [vmem:[%s1 + $0x78] sm:$0xff]
    %v77 = vld [vmem:[#allocation6] sm:$0xff]
    %v78 = vld [vmem:[#allocation6 + $0x8] sm:$0xff]
    %v79 = vld [vmem:[#allocation6 + $0x10] sm:$0xff]
    %v80 = vld [vmem:[#allocation6 + $0x18] sm:$0xff]
    %v81 = vld [vmem:[#allocation6 + $0x20] sm:$0xff]
    %v82 = vld [vmem:[#allocation6 + $0x28] sm:$0xff]
    %v83 = vld [vmem:[#allocation6 + $0x30] sm:$0xff]
    %v84 = vld [vmem:[#allocation6 + $0x38] sm:$0xff]
    %v85 = vld [vmem:[#allocation6 + $0x40] sm:$0xff]
    %v86 = vld [vmem:[#allocation6 + $0x48] sm:$0xff]
    %v87 = vld [vmem:[#allocation6 + $0x50] sm:$0xff]
    %v88 = vld [vmem:[#allocation6 + $0x58] sm:$0xff]
    %v89 = vld [vmem:[#allocation6 + $0x60] sm:$0xff]
    %v90 = vld [vmem:[#allocation6 + $0x68] sm:$0xff]
    %v91 = vld [vmem:[#allocation6 + $0x70] sm:$0xff]
    %v92 = vld [vmem:[#allocation6 + $0x78] sm:$0xff]
    %v93 = vld [vmem:[%s4] sm:$0xff]
    %v94 = vld [vmem:[%s4 + $0x8] sm:$0xff]
    %v95 = vld [vmem:[%s4 + $0x10] sm:$0xff]
    %v96 = vld [vmem:[%s4 + $0x18] sm:$0xff]
    %v97 = vld [vmem:[%s4 + $0x20] sm:$0xff]
    %v98 = vld [vmem:[%s4 + $0x28] sm:$0xff]
    %v99 = vld [vmem:[%s4 + $0x30] sm:$0xff]
    %v100 = vld [vmem:[%s4 + $0x38] sm:$0xff]
    %v101 = vld [vmem:[%s4 + $0x40] sm:$0xff]
    %v102 = vld [vmem:[%s4 + $0x48] sm:$0xff]
    %v103 = vld [vmem:[%s4 + $0x50] sm:$0xff]
    %v104 = vld [vmem:[%s4 + $0x58] sm:$0xff]
    %v105 = vld [vmem:[%s4 + $0x60] sm:$0xff]
    %v106 = vld [vmem:[%s4 + $0x68] sm:$0xff]
    %v107 = vld [vmem:[%s4 + $0x70] sm:$0xff]
    %v108 = vld [vmem:[%s4 + $0x78] sm:$0xff]
    %v109 = vld [vmem:[%s3] sm:$0x1]
    %111 = vset.pattern.permute.xlu0 0
    %112 = vperm.xlu0 %111, %v93
    %v113 = vpop.permute.xlu0 %112
    %116 = vset.pattern.permute.xlu0 0
    %117 = vperm.xlu0 %116, %v94
    %v118 = vpop.permute.xlu0 %117
    %121 = vset.pattern.permute.xlu0 0
    %122 = vperm.xlu0 %121, %v95
    %v123 = vpop.permute.xlu0 %122
    %126 = vset.pattern.permute.xlu0 0
    %127 = vperm.xlu0 %126, %v96
    %v128 = vpop.permute.xlu0 %127
    %131 = vset.pattern.permute.xlu0 0
    %132 = vperm.xlu0 %131, %v97
    %v133 = vpop.permute.xlu0 %132
    %136 = vset.pattern.permute.xlu0 0
    %137 = vperm.xlu0 %136, %v98
    %v138 = vpop.permute.xlu0 %137
    %141 = vset.pattern.permute.xlu0 0
    %142 = vperm.xlu0 %141, %v99
    %v143 = vpop.permute.xlu0 %142
    %146 = vset.pattern.permute.xlu0 0
    %147 = vperm.xlu0 %146, %v100
    %v148 = vpop.permute.xlu0 %147
    %151 = vset.pattern.permute.xlu0 0
    %152 = vperm.xlu0 %151, %v101
    %v153 = vpop.permute.xlu0 %152
    %156 = vset.pattern.permute.xlu0 0
    %157 = vperm.xlu0 %156, %v102
    %v158 = vpop.permute.xlu0 %157
    %161 = vset.pattern.permute.xlu0 0
    %162 = vperm.xlu0 %161, %v103
    %v163 = vpop.permute.xlu0 %162
    %166 = vset.pattern.permute.xlu0 0
    %167 = vperm.xlu0 %166, %v104
    %v168 = vpop.permute.xlu0 %167
    %171 = vset.pattern.permute.xlu0 0
    %172 = vperm.xlu0 %171, %v105
    %v173 = vpop.permute.xlu0 %172
    %176 = vset.pattern.permute.xlu0 0
    %177 = vperm.xlu0 %176, %v106
    %v178 = vpop.permute.xlu0 %177
    %181 = vset.pattern.permute.xlu0 0
    %182 = vperm.xlu0 %181, %v107
    %v183 = vpop.permute.xlu0 %182
    %186 = vset.pattern.permute.xlu0 0
    %187 = vperm.xlu0 %186, %v108
    %v188 = vpop.permute.xlu0 %187
    %v191 = vlaneseq
    %v192 = vshrl.u32 %v191, 7
    %v193 = vsub.s32 0, %v192
    %v194 = vrot.slane %v109, %v193
    %v196 = vmul.f32 %v113, %v194
    %v197 = vmul.f32 %v118, %v194
    %v198 = vmul.f32 %v123, %v194
    %v199 = vmul.f32 %v128, %v194
    %v200 = vmul.f32 %v133, %v194
    %v201 = vmul.f32 %v138, %v194
    %v202 = vmul.f32 %v143, %v194
    %v203 = vmul.f32 %v148, %v194
    %v204 = vmul.f32 %v153, %v194
    %v205 = vmul.f32 %v158, %v194
    %v206 = vmul.f32 %v163, %v194
    %v207 = vmul.f32 %v168, %v194
    %v208 = vmul.f32 %v173, %v194
    %v209 = vmul.f32 %v178, %v194
    %v210 = vmul.f32 %v183, %v194
    %v211 = vmul.f32 %v188, %v194
    %v212 = vmul.f32 %v77, %v196
    %v213 = vmul.f32 %v78, %v197
    %v214 = vmul.f32 %v79, %v198
    %v215 = vmul.f32 %v80, %v199
    %v216 = vmul.f32 %v81, %v200
    %v217 = vmul.f32 %v82, %v201
    %v218 = vmul.f32 %v83, %v202
    %v219 = vmul.f32 %v84, %v203
    %v220 = vmul.f32 %v85, %v204
    %v221 = vmul.f32 %v86, %v205
    %v222 = vmul.f32 %v87, %v206
    %v223 = vmul.f32 %v88, %v207
    %v224 = vmul.f32 %v89, %v208
    %v225 = vmul.f32 %v90, %v209
    %v226 = vmul.f32 %v91, %v210
    %v227 = vmul.f32 %v92, %v211
    %v228 = vadd.f32 %v61, %v212
    %v229 = vadd.f32 %v62, %v213
    %v230 = vadd.f32 %v63, %v214
    %v231 = vadd.f32 %v64, %v215
    %v232 = vadd.f32 %v65, %v216
    %v233 = vadd.f32 %v66, %v217
    %v234 = vadd.f32 %v67, %v218
    %v235 = vadd.f32 %v68, %v219
    %v236 = vadd.f32 %v69, %v220
    %v237 = vadd.f32 %v70, %v221
    %v238 = vadd.f32 %v71, %v222
    %v239 = vadd.f32 %v72, %v223
    %v240 = vadd.f32 %v73, %v224
    %v241 = vadd.f32 %v74, %v225
    %v242 = vadd.f32 %v75, %v226
    %v243 = vadd.f32 %v76, %v227
    %v244 = vld [vmem:[#allocation2] sm:$0xff]
    %v245 = vld [vmem:[#allocation3] sm:$0xff]
    %246 = vmatprep.subr.mxu0 0.0
    %247 = vmatpush1.xpose.msra.mxu0 %v243
    %248 = vmatprep.subr.mxu0 0.0
    %249 = vmatpush1.xpose.msra.mxu0 %v242
    %250 = vmatprep.subr.mxu0 0.0
    %251 = vmatpush1.xpose.msra.mxu0 %v241
    %252 = vmatprep.subr.mxu0 0.0
    %253 = vmatpush1.xpose.msra.mxu0 %v240
    %254 = vmatprep.subr.mxu0 0.0
    %255 = vmatpush1.xpose.msra.mxu0 %v239
    %256 = vmatprep.subr.mxu0 0.0
    %257 = vmatpush1.xpose.msra.mxu0 %v238
    %258 = vmatprep.subr.mxu0 0.0
    %259 = vmatpush1.xpose.msra.mxu0 %v237
    %260 = vmatprep.subr.mxu0 0.0
    %261 = vmatpush1.xpose.msra.mxu0 %v236
    %262 = vmatprep.subr.mxu0 0.0
    %263 = vmatpush1.xpose.msra.mxu0 %v235
    %264 = vmatprep.subr.mxu0 0.0
    %265 = vmatpush1.xpose.msra.mxu0 %v234
    %266 = vmatprep.subr.mxu0 0.0
    %267 = vmatpush1.xpose.msra.mxu0 %v233
    %268 = vmatprep.subr.mxu0 0.0
    %269 = vmatpush1.xpose.msra.mxu0 %v232
    %270 = vmatprep.subr.mxu0 0.0
    %271 = vmatpush1.xpose.msra.mxu0 %v231
    %272 = vmatprep.subr.mxu0 0.0
    %273 = vmatpush1.xpose.msra.mxu0 %v230
    %274 = vmatprep.subr.mxu0 0.0
    %275 = vmatpush1.xpose.msra.mxu0 %v229
    %276 = vmatprep.subr.mxu0 0.0
    %277 = vmatpush1.xpose.msra.mxu0 %v228
    %278 = vmatprep.subr.mxu0 0.0
    %279 = vmatpush2.xpose.msra.mxu0 0.0
    %280 = vmatprep.subr.mxu0 0.0
    %281 = vmatpush2.xpose.msra.mxu0 0.0
    %282 = vmatprep.subr.mxu0 0.0
    %283 = vmatpush2.xpose.msra.mxu0 0.0
    %284 = vmatprep.subr.mxu0 0.0
    %285 = vmatpush2.xpose.msra.mxu0 0.0
    %286 = vmatprep.subr.mxu0 0.0
    %287 = vmatpush2.xpose.msra.mxu0 0.0
    %288 = vmatprep.subr.mxu0 0.0
    %289 = vmatpush2.xpose.msra.mxu0 0.0
    %290 = vmatprep.subr.mxu0 0.0
    %291 = vmatpush2.xpose.msra.mxu0 0.0
    %292 = vmatprep.subr.mxu0 0.0
    %293 = vmatpush2.xpose.msra.mxu0 0.0
    %294 = vmatprep.subr.mxu0 0.0
    %295 = vmatpush2.xpose.msra.mxu0 0.0
    %296 = vmatprep.subr.mxu0 0.0
    %297 = vmatpush2.xpose.msra.mxu0 0.0
    %298 = vmatprep.subr.mxu0 0.0
    %299 = vmatpush2.xpose.msra.mxu0 0.0
    %300 = vmatprep.subr.mxu0 0.0
    %301 = vmatpush2.xpose.msra.mxu0 0.0
    %302 = vmatprep.subr.mxu0 0.0
    %303 = vmatpush2.xpose.msra.mxu0 0.0
    %304 = vmatprep.subr.mxu0 0.0
    %305 = vmatpush2.xpose.msra.mxu0 0.0
    %306 = vmatprep.subr.mxu0 0.0
    %307 = vmatpush2.xpose.msra.mxu0 0.0
    %308 = vmatprep.subr.mxu0 0.0
    %309 = vmatpush2.xpose.msra.mxu0 0.0
    %310 = vmatprep.mubr.f32.mxu0 0.0
    %311 = vmatmul.mubr.f32.gmra.mxu0 %v245
    %v312 = vpop.f32.mrf.mxu0
    %v313 = vadd.f32 0.0, %v312
    %v314 = vpop.f32.mrf.mxu0
    %315 = vdwg.mxu0
    %v316 = vadd.f32 %v244, %v313
    %317 = vst [vmem:[#allocation2] sm:$0xff] %v316
    // Predicated region
    $region46: #{tpu_custom_call.1} parent=1 // pred_check
      %p318 = pneg %p56
    $region47: #{tpu_custom_call.1} parent=1 // pred_check_branch
      %320 = sbr.rel (%p318) target = $region49
    $region48: #{tpu_custom_call.1} parent=1 // pred_region
      %v321 = vld [vmem:[%s5] sm:$0x1]
      %v322 = vld [vmem:[%s6] sm:$0x1]
      %v323 = vld [vmem:[%s7] sm:$0x1]
      %v324 = vmul.f32 %v322, %v323
      %v325 = vadd.f32 %v321, %v324
      %v326 = vld [vmem:[#allocation2] sm:$0xff]
      %v328 = vlaneseq
      %v329 = vshrl.u32 %v328, 7
      %v330 = vsub.s32 0, %v329
      %v331 = vrot.slane %v325, %v330
      %v333 = vadd.f32 %v326, %v331
      %334 = vst [vmem:[#allocation8] sm:$0xff] %v333
    $region49: #{tpu_custom_call.1} parent=1 // pred_fallthru
      _
    // Predicated region
    $region50: #{tpu_custom_call.1} parent=1 // pred_check
      _
    $region51: #{tpu_custom_call.1} parent=1 // pred_check_branch
      %336 = sbr.rel (0) target = $region53
    $region52: #{tpu_custom_call.1} parent=1 // pred_region
      %s338 = ssub.s32 128, 128
      %339 = vsyncadd [#allocation5], %s338
      %s341 = sshll.u32 [#allocation8], 4
      %s342 = int_to_ptr.vmem [resolvable:$true] %s341
      %344 = dma.vmem_to_hbm [thread:$0]  %s342, 128, %s8, [#allocation5]
    $region53: #{tpu_custom_call.1} parent=1 // pred_fallthru
      _
    // Predicated region
    $region54: #{tpu_custom_call.1} parent=1 // pred_check
      _
    $region55: #{tpu_custom_call.1} parent=1 // pred_check_branch
      %346 = sbr.rel (0) target = $region57
    $region56: #{tpu_custom_call.1} parent=1 // pred_region
      %347 = dma.done [#allocation5], 128
    $region57: #{tpu_custom_call.1} parent=1 // pred_fallthru
      _
    %348 = vsyncpa [#allocation4], 1
    %349 = vsyncpa [#allocation7], 1
    %350 = vsyncpa [#allocation5], 1

</llo_original>
